<compile_context>
chip_gen: v7x
topology: tpu7x:2x2x1
jax: 0.10.0
libtpu: 0.0.40
codegen_flags: <defaults>
</compile_context>

<pallas_src>
import jax
import jax.numpy as jnp
from jax import lax
from jax.experimental import pallas as pl
from jax.experimental.pallas import tpu as pltpu


def _make_ce_label_smooth_kernel(num_classes: int, epsilon: float,
                                 n_total: int, tile_n: int):
    inv_c = 1.0 / float(num_classes)

    def kernel(logits_ref, targets_ref, out_ref):
        # logits_ref: (tile_n, C) (any float dtype), targets_ref: (tile_n, 1) int32,
        # out_ref: (1, 1) f32 in SMEM (per-tile partial sum of row losses).
        i = pl.program_id(0)

        x = logits_ref[...].astype(jnp.float32)          # (tile_n, C)
        t = targets_ref[...]                             # (tile_n, 1) int32
        tn, c = x.shape

        # Validity mask for zero-padded rows of the remainder tile.
        rows = lax.broadcasted_iota(jnp.int32, (tn, 1), 0) + i * tile_n
        valid = rows < n_total                           # (tile_n, 1) bool

        # Per-row reductions (single exp pass, no (N, C) intermediates kept).
        m = jnp.max(x, axis=1, keepdims=True)                          # (tile_n, 1)
        sum_exp = jnp.sum(jnp.exp(x - m), axis=1, keepdims=True)       # (tile_n, 1)
        lse = m + jnp.log(sum_exp)                                     # full logsumexp
        sum_x = jnp.sum(x, axis=1, keepdims=True)                      # (tile_n, 1)

        # x[i, t_i] via iota-compare + masked sum (the scatter_/one-hot equivalent).
        classes = lax.broadcasted_iota(jnp.int32, (tn, c), 1)          # (tile_n, C)
        x_t = jnp.sum(jnp.where(classes == t, x, 0.0), axis=1, keepdims=True)

        # loss_i = (1-eps)*(lse_i - x_t_i) + (eps/C)*(C*lse_i - sum_x_i)
        row_loss = (1.0 - epsilon) * (lse - x_t) \
                 + (epsilon * inv_c) * (float(c) * lse - sum_x)
        row_loss = jnp.where(valid, row_loss, 0.0)

        out_ref[0, 0] = jnp.sum(row_loss)

    return kernel


def _choose_tile_n(n: int, c: int, itemsize: int) -> int:
    """Largest batch tile whose double-buffered logits block stays ~16 MiB."""
    if n <= 8:
        return n
    per_buffer_budget = 8 * 1024 * 1024                  # 2 buffers -> ~16 MiB
    t = per_buffer_budget // max(1, c * itemsize)
    t = max(8, min(t, n, 1024))
    return (t // 8) * 8                                  # multiple of 8 sublanes


def cross_entropy_label_smooth(logits, targets, num_classes, epsilon=0.1,
                               tile_n=None):
    """Pallas-TPU equivalent of CrossEntropyLabelSmooth.forward."""
    n, c = logits.shape
    if tile_n is None:
        tile_n = _choose_tile_n(n, c, jnp.dtype(logits.dtype).itemsize)
    num_tiles = pl.cdiv(n, tile_n)

    targets2d = targets.reshape(n, 1).astype(jnp.int32)

    partials = pl.pallas_call(
        _make_ce_label_smooth_kernel(num_classes, float(epsilon), n, tile_n),
        out_shape=jax.ShapeDtypeStruct((num_tiles, 1), jnp.float32),
        grid=(num_tiles,),
        in_specs=[
            # Logits: (tile_n, C) row tiles; C stays whole (lane axis).
            pl.BlockSpec((tile_n, c), lambda i: (i, 0)),
            # Targets: matching (tile_n, 1) int32 tile.
            pl.BlockSpec((tile_n, 1), lambda i: (i, 0)),
        ],
        # Per-tile scalar partials in SMEM; independent tiles -> "parallel" axis.
        out_specs=pl.BlockSpec((1, 1), lambda i: (i, 0),
                               memory_space=pltpu.SMEM),
        compiler_params=pltpu.CompilerParams(
            dimension_semantics=("parallel",),
            vmem_limit_bytes=48 * 1024 * 1024,
        ),
    )(logits, targets2d)

    # Final tiny reduction + mean over batch done in plain JAX.
    return jnp.sum(partials) / n


def _reference(logits, targets, num_classes, epsilon=0.1):
    # Pure-JAX reference mirroring the PyTorch module.
    log_probs = jax.nn.log_softmax(logits.astype(jnp.float32), axis=1)
    onehot = jax.nn.one_hot(targets, num_classes, dtype=jnp.float32)
    smoothed = (1.0 - epsilon) * onehot + epsilon / num_classes
    return jnp.sum(jnp.mean(-smoothed * log_probs, axis=0))


if __name__ == "__main__":
    key = jax.random.PRNGKey(0)
    k1, k2, k3, k4 = jax.random.split(key, 4)

    # Case 1: small single-tile case (batch=8, classes=32), f32.
    num_classes, batch, eps = 32, 8, 0.1
    logits = jax.random.normal(k1, (batch, num_classes), dtype=jnp.float32)
    targets = jax.random.randint(k2, (batch,), 0, num_classes, dtype=jnp.int32)

    loss = jax.block_until_ready(
        cross_entropy_label_smooth(logits, targets, num_classes, eps))
    ref = jax.block_until_ready(_reference(logits, targets, num_classes, eps))
    assert jnp.allclose(loss, ref, rtol=1e-5, atol=1e-5), (loss, ref)

    # Case 1b: bf16 logits streamed as bf16 (cast happens inside the kernel).
    logits_bf16 = logits.astype(jnp.bfloat16)
    loss_bf16 = jax.block_until_ready(
        cross_entropy_label_smooth(logits_bf16, targets, num_classes, eps))
    ref_bf16 = jax.block_until_ready(
        _reference(logits_bf16, targets, num_classes, eps))
    assert jnp.allclose(loss_bf16, ref_bf16, rtol=1e-4, atol=1e-4), (loss_bf16, ref_bf16)

    # Case 2: multi-tile grid with a remainder tile (exercises row masking):
    # batch=20, classes=128, tile_n=8 -> 3 tiles, last tile has 4 valid rows.
    num_classes2, batch2 = 128, 20
    logits2 = jax.random.normal(k3, (batch2, num_classes2), dtype=jnp.float32)
    targets2 = jax.random.randint(k4, (batch2,), 0, num_classes2, dtype=jnp.int32)

    loss2 = jax.block_until_ready(
        cross_entropy_label_smooth(logits2, targets2, num_classes2, eps, tile_n=8))
    ref2 = jax.block_until_ready(
        _reference(logits2, targets2, num_classes2, eps))
    assert jnp.allclose(loss2, ref2, rtol=1e-5, atol=1e-5), (loss2, ref2)

    print("KERNEL_OK")
</pallas_src>

<mosaic_0001>
module attributes {stable_mosaic.version = 11 : i64} {
  func.func @kernel(%arg0: i32, %arg1: memref<8x32xf32, #tpu.memory_space<vmem>>, %arg2: memref<8x1xi32, #tpu.memory_space<vmem>>, %arg3: memref<1x1xf32, #tpu.memory_space<smem>>) attributes {dimension_semantics = [#tpu.dimension_semantics<parallel>], iteration_bounds = array<i64: 1>, scalar_prefetch = 0 : i64, scratch_operands = 0 : i64, tpu.core_type = #tpu.core_type<tc>, window_params = [{transform_indices = @transform_0, window_bounds = array<i64: 8, 32>}, {transform_indices = @transform_1, window_bounds = array<i64: 8, 1>}, {transform_indices = @transform_2, window_bounds = array<i64: 1, 1>}]} {
    %c0 = arith.constant 0 : index
    %c0_0 = arith.constant 0 : index
    %0 = vector.load %arg1[%c0, %c0_0] : memref<8x32xf32, #tpu.memory_space<vmem>>, vector<8x32xf32>
    %c0_1 = arith.constant 0 : index
    %c0_2 = arith.constant 0 : index
    %1 = vector.load %arg2[%c0_1, %c0_2] : memref<8x1xi32, #tpu.memory_space<vmem>>, vector<8x1xi32>
    %2 = tpu.iota {dimensions = array<i32: 0>} : vector<8x1xi32>
    %c8_i32 = arith.constant 8 : i32
    %3 = arith.muli %arg0, %c8_i32 : i32
    %4 = vector.broadcast %3 : i32 to vector<8x1xi32>
    %5 = arith.addi %2, %4 : vector<8x1xi32>
    %c8_i32_3 = arith.constant 8 : i32
    %6 = vector.broadcast %c8_i32_3 : i32 to vector<8x1xi32>
    %7 = arith.cmpi slt, %5, %6 : vector<8x1xi32>
    %cst = arith.constant dense<0xFF800000> : vector<8xf32>
    %8 = vector.multi_reduction <maximumf>, %0, %cst [1] : vector<8x32xf32> to vector<8xf32>
    %9 = vector.shape_cast %8 : vector<8xf32> to vector<8x1xf32>
    %10 = vector.broadcast %9 : vector<8x1xf32> to vector<8x32xf32>
    %11 = arith.subf %0, %10 : vector<8x32xf32>
    %12 = math.exp %11 : vector<8x32xf32>
    %cst_4 = arith.constant dense<0.000000e+00> : vector<8xf32>
    %13 = vector.multi_reduction <add>, %12, %cst_4 [1] : vector<8x32xf32> to vector<8xf32>
    %14 = vector.shape_cast %13 : vector<8xf32> to vector<8x1xf32>
    %15 = math.log %14 : vector<8x1xf32>
    %16 = arith.addf %9, %15 : vector<8x1xf32>
    %cst_5 = arith.constant dense<0.000000e+00> : vector<8xf32>
    %17 = vector.multi_reduction <add>, %0, %cst_5 [1] : vector<8x32xf32> to vector<8xf32>
    %18 = vector.shape_cast %17 : vector<8xf32> to vector<8x1xf32>
    %19 = tpu.iota {dimensions = array<i32: 1>} : vector<8x32xi32>
    %20 = vector.broadcast %1 : vector<8x1xi32> to vector<8x32xi32>
    %21 = arith.cmpi eq, %19, %20 : vector<8x32xi32>
    %cst_6 = arith.constant 0.000000e+00 : f32
    %22 = vector.broadcast %cst_6 : f32 to vector<8x32xf32>
    %23 = arith.select %21, %0, %22 : vector<8x32xi1>, vector<8x32xf32>
    %cst_7 = arith.constant dense<0.000000e+00> : vector<8xf32>
    %24 = vector.multi_reduction <add>, %23, %cst_7 [1] : vector<8x32xf32> to vector<8xf32>
    %25 = vector.shape_cast %24 : vector<8xf32> to vector<8x1xf32>
    %26 = arith.subf %16, %25 : vector<8x1xf32>
    %cst_8 = arith.constant 0.899999976 : f32
    %27 = vector.broadcast %cst_8 : f32 to vector<8x1xf32>
    %28 = arith.mulf %27, %26 : vector<8x1xf32>
    %cst_9 = arith.constant 3.200000e+01 : f32
    %29 = vector.broadcast %cst_9 : f32 to vector<8x1xf32>
    %30 = arith.mulf %29, %16 : vector<8x1xf32>
    %31 = arith.subf %30, %18 : vector<8x1xf32>
    %cst_10 = arith.constant 3.125000e-03 : f32
    %32 = vector.broadcast %cst_10 : f32 to vector<8x1xf32>
    %33 = arith.mulf %32, %31 : vector<8x1xf32>
    %34 = arith.addf %28, %33 : vector<8x1xf32>
    %cst_11 = arith.constant 0.000000e+00 : f32
    %35 = vector.broadcast %cst_11 : f32 to vector<8x1xf32>
    %36 = arith.select %7, %34, %35 : vector<8x1xi1>, vector<8x1xf32>
    %37 = vector.shape_cast %36 : vector<8x1xf32> to vector<1x8x1xf32>
    %cst_12 = arith.constant dense<0.000000e+00> : vector<1xf32>
    %38 = vector.multi_reduction <add>, %37, %cst_12 [1, 2] : vector<1x8x1xf32> to vector<1xf32>
    %39 = vector.shape_cast %38 : vector<1xf32> to vector<1x1x1xf32>
    %40 = vector.extract %39[0, 0, 0] : f32 from vector<1x1x1xf32>
    %c0_13 = arith.constant 0 : index
    %c0_14 = arith.constant 0 : index
    %41 = memref.load %arg3[%c0_13, %c0_14] : memref<1x1xf32, #tpu.memory_space<smem>>
    memref.store %40, %arg3[%c0_13, %c0_14] : memref<1x1xf32, #tpu.memory_space<smem>>
    return
  }
  func.func @transform_0(%arg0: i32) -> (i32, i32) {
    %c0_i32 = arith.constant 0 : i32
    %c0_i32_0 = arith.constant 0 : i32
    return %arg0, %c0_i32 : i32, i32
  }
  func.func @transform_1(%arg0: i32) -> (i32, i32) {
    %c0_i32 = arith.constant 0 : i32
    %c0_i32_0 = arith.constant 0 : i32
    return %arg0, %c0_i32 : i32, i32
  }
  func.func @transform_2(%arg0: i32) -> (i32, i32) {
    %c0_i32 = arith.constant 0 : i32
    %c0_i32_0 = arith.constant 0 : i32
    return %arg0, %c0_i32 : i32, i32
  }
}

</mosaic_0001>

<llo_original>
// kernel: tpu_custom_call.1
$region0: #{tpu_custom_call.1}
  #allocation0 [shape = 'u32[]', space=smem, size = 0x4, offset = 0x4, fixed_abs, tag = 'smem constant byte address 0x4 - core index']
  #allocation1 [shape = 'u32[144,128]{1,0:T(1,128)}', space=vmem, size = 0x12000, scoped, tag = 'internal scratch']
  %s0 = inlined_call_operand.vmem [shape: f32[8,32], index: 0, kind: input, shape index: {}]
  %s1 = inlined_call_operand.vmem [shape: s32[8,1], index: 1, kind: input, shape index: {}]
  %s2 = inlined_call_operand.hbm [shape: f32[1,1], index: 2, kind: output, shape index: {}]
  %s3 = sld [smem:[#allocation0]]
  $region18: #{tpu_custom_call.1} parent=0
    _
  %s5 = ssub.s32 1, %s3
  %s6 = scalar_select 0, %s5, %s3
  $region1: #{tpu_custom_call.1} parent=0
    #allocation2 [shape = 'u8[512]{0}', space=smem, size = 0x200, scoped, tag = 'output window, operand 0, single buffered']
    #allocation3 [shape = 's32[1]{0}', space=sflag, size = 0x4, scoped, tag = 'scoped memory for tpu_custom_call.1']
    %7 = vsyncpa [#allocation3], 0
    // Predicated region
    $region2: #{tpu_custom_call.1} parent=1 // pred_check
      _
    $region3: #{tpu_custom_call.1} parent=1 // pred_check_branch
      %9 = sbr.rel (0) target = $region5
    $region4: #{tpu_custom_call.1} parent=1 // pred_region
      _
    $region5: #{tpu_custom_call.1} parent=1 // pred_fallthru
      _
    // Predicated region
    $region6: #{tpu_custom_call.1} parent=1 // pred_check
      _
    $region7: #{tpu_custom_call.1} parent=1 // pred_check_branch
      %11 = sbr.rel (0) target = $region9
    $region8: #{tpu_custom_call.1} parent=1 // pred_region
      _
    $region9: #{tpu_custom_call.1} parent=1 // pred_fallthru
      _
    %v12 = vld [vmem:[%s0] sm:$0xff]
    %v13 = vld [vmem:[%s1] sm:$0xff]
    %v14 = vlaneseq
    %v15 = vshrl.u32 %v14, 7
    %s16 = smul.u32 0, 8
    %v17 = vstv %s16
    %v18 = vadd.s32 %v15, %v17
    %vm19 = vcmp.lt.s32.totalorder %v18, 8
    %vm20 = vcmask 261120
    %v21 = vsel %vm20, %v12, -inf
    %22 = vmax.xlane.f32.xlu0 %v21
    %v23 = vpop.xlane.xlu0 %22
    %v24 = vsub.f32 %v12, %v23
    %v25 = vmul.f32 %v24, 1.442695
    %v26 = vpow.pop %v25
    %v27 = vsel %vm20, %v26, 0.0
    %28 = vadd.xlane.f32.xlu0 %v27
    %v29 = vpop.xlane.xlu0 %28
    %v30 = vlog2.pop %v29
    %v31 = vmul.f32 %v30, 0.6931472
    %v32 = vadd.f32 %v23, %v31
    %v33 = vsel %vm20, %v12, 0.0
    %34 = vadd.xlane.f32.xlu0 %v33
    %v35 = vpop.xlane.xlu0 %34
    %v36 = vlaneseq
    %v37 = vand.u32 %v36, 127
    %38 = vset.pattern.permute.xlu0 0
    %39 = vperm.xlu0 %38, %v13
    %v40 = vpop.permute.xlu0 %39
    %vm41 = vcmp.eq.s32.totalorder %v37, %v40
    %v42 = vsel %vm41, %v12, 0.0
    %v43 = vsel %vm20, %v42, 0.0
    %44 = vadd.xlane.f32.xlu0 %v43
    %v45 = vpop.xlane.xlu0 %44
    %v46 = vsub.f32 %v32, %v45
    %v47 = vmul.f32 %v46, 0.9
    %v48 = vmul.f32 %v32, 32.0
    %v49 = vsub.f32 %v48, %v35
    %v50 = vmul.f32 %v49, 0.003125
    %v51 = vadd.f32 %v47, %v50
    %v52 = vsel %vm19, %v51, 0.0
    %vm53 = vcmask 7168
    %v54 = vsel %vm53, %v52, 0.0
    %55 = vadd.xlane.f32.xlu0 %v54
    %v56 = vpop.xlane.xlu0 %55
    %v57 = vrot.slane %v56, 4
    %v58 = vadd.f32 %v56, %v57
    %v59 = vrot.slane %v58, 2
    %v60 = vadd.f32 %v58, %v59
    %v61 = vrot.slane %v60, 1
    %v62 = vadd.f32 %v60, %v61
    %s63 = vtos %v62
    %s64 = scalar_lea.smem [#allocation2], 0
    %65 = sst [smem:[%s64]] %s63
    // Predicated region
    $region10: #{tpu_custom_call.1} parent=1 // pred_check
      _
    $region11: #{tpu_custom_call.1} parent=1 // pred_check_branch
      %67 = sbr.rel (0) target = $region13
    $region12: #{tpu_custom_call.1} parent=1 // pred_region
      %s69 = ssub.s32 16, 16
      %70 = vsyncadd [#allocation3], %s69
      %73 = dma.smem_to_hbm [#allocation2], 16, %s2, [#allocation3]
    $region13: #{tpu_custom_call.1} parent=1 // pred_fallthru
      _
    // Predicated region
    $region14: #{tpu_custom_call.1} parent=1 // pred_check
      _
    $region15: #{tpu_custom_call.1} parent=1 // pred_check_branch
      %75 = sbr.rel (0) target = $region17
    $region16: #{tpu_custom_call.1} parent=1 // pred_region
      %76 = dma.done [#allocation3], 16
    $region17: #{tpu_custom_call.1} parent=1 // pred_fallthru
      _
    %77 = sfence
    %78 = vsyncpa [#allocation3], 1

</llo_original>
